<compile_context>
chip_gen: v5e
topology: v5e:2x2
jax: 0.10.0
libtpu: 0.0.40
codegen_flags: <defaults>
</compile_context>

<pallas_src>
import jax
import jax.numpy as jnp
from jax import lax
from jax.experimental import pallas as pl
from jax.experimental.pallas import tpu as pltpu

VOCAB = 64        # input_size
HIDDEN = 32       # hidden_size
LANE = 128        # TPU vreg lane width; each gate group padded to 128 lanes
T_BUCKET = 8      # minimum padded sequence length (bucketed to pow2 >= 8)


# --------------------------------------------------------------------------
# Kernel: full sequence in one invocation.
#   Lane layout (2*LANE = 256 output lanes):
#     group 0 (lanes   0:128): r at 0:32, z at 32:64, rest zero
#     group 1 (lanes 128:256): n at 0:32,            rest zero
# --------------------------------------------------------------------------
def gru_seq_kernel(scal_ref,   # SMEM (1+Tp,) int32: [n_valid, tok_0 .. tok_{Tp-1}]
                   emb_ref,    # (VOCAB, LANE)   embedding table, VMEM-resident
                   h0_ref,     # (1, LANE)       initial hidden, lanes 0:H live
                   wi_ref,     # (LANE, 2*LANE)  input  projection weights
                   bi_ref,     # (1, 2*LANE)     [b_ir+b_hr | b_iz+b_hz | b_in]
                   wh_ref,     # (LANE, 2*LANE)  hidden projection weights
                   bh_ref,     # (1, 2*LANE)     only b_hn lanes nonzero
                   out_ref,    # (Tp, LANE)      per-step hidden states
                   x_scr,      # (Tp, LANE)      gathered embedding rows
                   gi_scr):    # (Tp, 2*LANE)    hoisted input projections
    t_pad = out_ref.shape[0]
    n_valid = scal_ref[0]

    # Defined values for the (unused) padded output rows.
    out_ref[...] = jnp.zeros_like(out_ref)

    # ---- Gather embedding rows for all padded steps (off the serial chain).
    def gather(t, carry):
        tok = scal_ref[1 + t]
        x_scr[pl.ds(t, 1), :] = emb_ref[pl.ds(tok, 1), :]
        return carry
    lax.fori_loop(0, t_pad, gather, 0, unroll=True)

    # ---- Hoisted input projection for ALL steps: one (Tp,128)x(128,256) pass.
    gi_scr[...] = jnp.dot(x_scr[...], wi_ref[...],
                          preferred_element_type=jnp.float32) + bi_ref[...]

    wh = wh_ref[...]
    bh = bh_ref[...]

    # ---- Serial GRU recurrence; hidden state carried in vregs.
    def step(t, h):                                      # h: (1, LANE)
        gh = jnp.dot(h, wh, preferred_element_type=jnp.float32) + bh   # (1,256)
        gi = gi_scr[pl.ds(t, 1), :]                                    # (1,256)
        # One sigmoid covers r (lanes 0:H) and z (lanes H:2H).
        a = jax.nn.sigmoid(gi[:, :LANE] + gh[:, :LANE])
        # r is already lane-aligned with gh_n (both at lanes 0:H of group 1).
        n_new = jnp.tanh(gi[:, LANE:] + a * gh[:, LANE:])
        # Realign z (lanes H:2H) down to lanes 0:H — XLU lane rotate.
        z = pltpu.roll(a, shift=LANE - HIDDEN, axis=1)
        h_new = (1.0 - z) * n_new + z * h                # padded lanes stay 0
        out_ref[pl.ds(t, 1), :] = h_new
        return h_new

    lax.fori_loop(0, n_valid, step, h0_ref[...])


# --------------------------------------------------------------------------
# One-time parameter preparation (hoisted out of the forward path).
# --------------------------------------------------------------------------
def prepare_params(params):
    H, L = HIDDEN, LANE
    f32 = jnp.float32

    emb_pad = jnp.zeros((VOCAB, L), f32).at[:, :H].set(
        params["embedding"].astype(f32))

    wih_t = params["w_ih"].T.astype(f32)   # (H, 3H), gate columns [r | z | n]
    whh_t = params["w_hh"].T.astype(f32)

    wi = jnp.zeros((L, 2 * L), f32)        # x lives at rows 0:H
    wi = wi.at[0:H, 0:H].set(wih_t[:, 0:H])                  # r -> lanes 0:H
    wi = wi.at[0:H, H:2 * H].set(wih_t[:, H:2 * H])          # z -> lanes H:2H
    wi = wi.at[0:H, L:L + H].set(wih_t[:, 2 * H:3 * H])      # n -> lanes L:L+H

    wh = jnp.zeros((L, 2 * L), f32)        # h lives at rows 0:H
    wh = wh.at[0:H, 0:H].set(whh_t[:, 0:H])
    wh = wh.at[0:H, H:2 * H].set(whh_t[:, H:2 * H])
    wh = wh.at[0:H, L:L + H].set(whh_t[:, 2 * H:3 * H])

    bih = params["b_ih"].astype(f32)
    bhh = params["b_hh"].astype(f32)
    bi = jnp.zeros((1, 2 * L), f32)
    bi = bi.at[0, 0:H].set(bih[0:H] + bhh[0:H])              # r biases fused
    bi = bi.at[0, H:2 * H].set(bih[H:2 * H] + bhh[H:2 * H])  # z biases fused
    bi = bi.at[0, L:L + H].set(bih[2 * H:3 * H])             # b_ih_n
    bh = jnp.zeros((1, 2 * L), f32)
    bh = bh.at[0, L:L + H].set(bhh[2 * H:3 * H])             # b_hh_n (scaled by r)

    return {"emb": emb_pad, "wi": wi, "bi": bi, "wh": wh, "bh": bh}


# --------------------------------------------------------------------------
# Pallas call + forward wrappers.
# --------------------------------------------------------------------------
def _encode_call(scalars, h0, emb, wi, bi, wh, bh):
    t_pad = scalars.shape[0] - 1
    grid_spec = pltpu.PrefetchScalarGridSpec(
        num_scalar_prefetch=1,
        grid=(1,),
        in_specs=[
            pl.BlockSpec((VOCAB, LANE), lambda i, s: (0, 0)),      # whole emb table
            pl.BlockSpec((1, LANE), lambda i, s: (0, 0)),
            pl.BlockSpec((LANE, 2 * LANE), lambda i, s: (0, 0)),
            pl.BlockSpec((1, 2 * LANE), lambda i, s: (0, 0)),
            pl.BlockSpec((LANE, 2 * LANE), lambda i, s: (0, 0)),
            pl.BlockSpec((1, 2 * LANE), lambda i, s: (0, 0)),
        ],
        out_specs=pl.BlockSpec((t_pad, LANE), lambda i, s: (0, 0)),
        scratch_shapes=[pltpu.VMEM((t_pad, LANE), jnp.float32),
                        pltpu.VMEM((t_pad, 2 * LANE), jnp.float32)],
    )
    return pl.pallas_call(
        gru_seq_kernel,
        grid_spec=grid_spec,
        out_shape=jax.ShapeDtypeStruct((t_pad, LANE), jnp.float32),
        compiler_params=pltpu.CompilerParams(
            dimension_semantics=("arbitrary",)),   # single sequential step
    )(scalars, emb, h0, wi, bi, wh, bh)


@jax.jit
def _encode_padded(tokens_padded, n_valid, hidden, emb, wi, bi, wh, bh):
    toks = jnp.clip(tokens_padded.astype(jnp.int32), 0, VOCAB - 1)  # no OOB reads
    scalars = jnp.concatenate([n_valid.reshape(1).astype(jnp.int32), toks])
    h0 = jnp.zeros((1, LANE), jnp.float32).at[:, :HIDDEN].set(
        hidden.reshape(1, HIDDEN).astype(jnp.float32))
    out = _encode_call(scalars, h0, emb, wi, bi, wh, bh)
    return out[:, :HIDDEN]


def _bucket(T):
    return max(T_BUCKET, 1 << (T - 1).bit_length())


def encoder_rnn_encode(tokens, hidden, prepped):
    """Encode a whole token sequence with ONE pallas_call.
    tokens: (T,) int, hidden: (1,1,H) -> (outputs (T,1,H), hidden (1,1,H))."""
    T = int(tokens.shape[0])
    t_pad = _bucket(T)
    toks_p = jnp.zeros((t_pad,), jnp.int32).at[:T].set(
        jnp.asarray(tokens, jnp.int32))
    out = _encode_padded(toks_p, jnp.asarray(T, dtype=jnp.int32), hidden,
                         prepped["emb"], prepped["wi"], prepped["bi"],
                         prepped["wh"], prepped["bh"])
    outputs = out[:T].reshape(T, 1, HIDDEN)
    final_hidden = outputs[-1].reshape(1, 1, HIDDEN)
    return outputs, final_hidden


def encoder_rnn_forward(token_idx, hidden, prepped):
    """Original EncoderRNN.forward API: one token step.
    token_idx: (1,) int, hidden: (1,1,H) -> (output, hidden), both (1,1,H).
    Re-uses the same compiled T<=8 bucket kernel for every call."""
    outputs, new_hidden = encoder_rnn_encode(
        jnp.asarray(token_idx, jnp.int32).reshape(1), hidden, prepped)
    return outputs.reshape(1, 1, HIDDEN), new_hidden


# --------------------------------------------------------------------------
# Parameter init + pure-JAX reference (mirrors the PyTorch module).
# --------------------------------------------------------------------------
def init_params(key, vocab, hidden):
    k0, k1, k2, k3, k4 = jax.random.split(key, 5)
    scale = 1.0 / jnp.sqrt(hidden)
    return {
        "embedding": jax.random.normal(k0, (vocab, hidden), jnp.float32),
        "w_ih": jax.random.uniform(k1, (3 * hidden, hidden), jnp.float32,
                                   -scale, scale),
        "w_hh": jax.random.uniform(k2, (3 * hidden, hidden), jnp.float32,
                                   -scale, scale),
        "b_ih": jax.random.uniform(k3, (3 * hidden,), jnp.float32, -scale, scale),
        "b_hh": jax.random.uniform(k4, (3 * hidden,), jnp.float32, -scale, scale),
    }


def _reference_step(tok, h, params):
    H = HIDDEN
    x = params["embedding"][tok].reshape(1, H)
    gi = x @ params["w_ih"].T + params["b_ih"]
    gh = h @ params["w_hh"].T + params["b_hh"]
    r = jax.nn.sigmoid(gi[:, 0:H] + gh[:, 0:H])
    z = jax.nn.sigmoid(gi[:, H:2 * H] + gh[:, H:2 * H])
    n = jnp.tanh(gi[:, 2 * H:3 * H] + r * gh[:, 2 * H:3 * H])
    return (1.0 - z) * n + z * h


def reference_sequence(tokens, hidden, params):
    h = hidden.reshape(1, HIDDEN)
    outs = []
    for i in range(tokens.shape[0]):
        h = _reference_step(tokens[i], h, params)
        outs.append(h)
    return jnp.stack(outs).reshape(-1, 1, HIDDEN), h.reshape(1, 1, HIDDEN)


if __name__ == "__main__":
    key = jax.random.PRNGKey(0)
    params = init_params(key, VOCAB, HIDDEN)
    prepped = prepare_params(params)      # one-time weight fusion / padding

    T = 8
    tokens = jax.random.randint(jax.random.fold_in(key, 1), (T,), 0, VOCAB,
                                dtype=jnp.int32)
    hidden0 = jnp.zeros((1, 1, HIDDEN), jnp.float32)  # initHidden()

    # Full-sequence encode: all T GRU steps inside one pallas_call invocation.
    outs, hid = encoder_rnn_encode(tokens, hidden0, prepped)
    outs = jax.block_until_ready(outs)
    hid = jax.block_until_ready(hid)

    ref_outs, ref_hid = reference_sequence(tokens, hidden0, params)
    assert outs.shape == (T, 1, HIDDEN) and hid.shape == (1, 1, HIDDEN)
    assert jnp.allclose(outs, ref_outs, atol=1e-4, rtol=1e-4)
    assert jnp.allclose(hid, ref_hid, atol=1e-4, rtol=1e-4)

    # Non-bucket-multiple length: reuses the same compiled kernel (masked loop).
    T2 = 5
    outs2, hid2 = encoder_rnn_encode(tokens[:T2], hidden0, prepped)
    outs2 = jax.block_until_ready(outs2)
    ref_outs2, ref_hid2 = reference_sequence(tokens[:T2], hidden0, params)
    assert jnp.allclose(outs2, ref_outs2, atol=1e-4, rtol=1e-4)
    assert jnp.allclose(hid2, ref_hid2, atol=1e-4, rtol=1e-4)

    # Original single-step module API.
    out1, hid1 = encoder_rnn_forward(tokens[0:1], hidden0, prepped)
    out1 = jax.block_until_ready(out1)
    ref_out1, ref_hid1 = reference_sequence(tokens[0:1], hidden0, params)
    assert out1.shape == (1, 1, HIDDEN) and hid1.shape == (1, 1, HIDDEN)
    assert jnp.allclose(out1, ref_out1, atol=1e-4, rtol=1e-4)
    assert jnp.allclose(hid1, ref_hid1, atol=1e-4, rtol=1e-4)

    print("KERNEL_OK")
</pallas_src>

<mosaic_0001>
module attributes {stable_mosaic.version = 11 : i64} {
  func.func @gru_seq_kernel(%arg0: i32, %arg1: memref<9xi32, #tpu.memory_space<smem>>, %arg2: memref<64x128xf32, #tpu.memory_space<vmem>>, %arg3: memref<1x128xf32, #tpu.memory_space<vmem>>, %arg4: memref<128x256xf32, #tpu.memory_space<vmem>>, %arg5: memref<1x256xf32, #tpu.memory_space<vmem>>, %arg6: memref<128x256xf32, #tpu.memory_space<vmem>>, %arg7: memref<1x256xf32, #tpu.memory_space<vmem>>, %arg8: memref<8x128xf32, #tpu.memory_space<vmem>>, %arg9: memref<8x128xf32, #tpu.memory_space<vmem>>, %arg10: memref<8x256xf32, #tpu.memory_space<vmem>>) attributes {dimension_semantics = [#tpu.dimension_semantics<arbitrary>], iteration_bounds = array<i64: 1>, scalar_prefetch = 1 : i64, scratch_operands = 2 : i64, tpu.core_type = #tpu.core_type<tc>, window_params = [{pipeline_mode = #tpu.pipeline_mode<synchronous>, transform_indices = @transform_0, window_bounds = array<i64: 64, 128>}, {pipeline_mode = #tpu.pipeline_mode<synchronous>, transform_indices = @transform_1, window_bounds = array<i64: 1, 128>}, {pipeline_mode = #tpu.pipeline_mode<synchronous>, transform_indices = @transform_2, window_bounds = array<i64: 128, 256>}, {pipeline_mode = #tpu.pipeline_mode<synchronous>, transform_indices = @transform_3, window_bounds = array<i64: 1, 256>}, {pipeline_mode = #tpu.pipeline_mode<synchronous>, transform_indices = @transform_4, window_bounds = array<i64: 128, 256>}, {pipeline_mode = #tpu.pipeline_mode<synchronous>, transform_indices = @transform_5, window_bounds = array<i64: 1, 256>}, {pipeline_mode = #tpu.pipeline_mode<synchronous>, transform_indices = @transform_6, window_bounds = array<i64: 8, 128>}]} {
    %c0 = arith.constant 0 : index
    %0 = memref.load %arg1[%c0] : memref<9xi32, #tpu.memory_space<smem>>
    %cst = arith.constant 0.000000e+00 : f32
    %1 = vector.broadcast %cst : f32 to vector<8x128xf32>
    %c0_0 = arith.constant 0 : index
    %c0_1 = arith.constant 0 : index
    %2 = vector.load %arg8[%c0_0, %c0_1] : memref<8x128xf32, #tpu.memory_space<vmem>>, vector<8x128xf32>
    tpu.vector_store %arg8[%c0_0, %c0_1], %1 {strides = array<i32>} : memref<8x128xf32, #tpu.memory_space<vmem>>, vector<8x128xf32>,
    %c0_i32 = arith.constant 0 : i32
    %c1_i32 = arith.constant 1 : i32
    %3 = arith.addi %c1_i32, %c0_i32 : i32
    %4 = arith.index_cast %3 : i32 to index
    %5 = memref.load %arg1[%4] : memref<9xi32, #tpu.memory_space<smem>>
    %6 = arith.index_cast %5 : i32 to index
    %c0_2 = arith.constant 0 : index
    %7 = vector.load %arg2[%6, %c0_2] : memref<64x128xf32, #tpu.memory_space<vmem>>, vector<1x128xf32>
    %8 = arith.index_cast %c0_i32 : i32 to index
    %c0_3 = arith.constant 0 : index
    %9 = vector.load %arg9[%8, %c0_3] : memref<8x128xf32, #tpu.memory_space<vmem>>, vector<1x128xf32>
    tpu.vector_store %arg9[%8, %c0_3], %7 {strides = array<i32>} : memref<8x128xf32, #tpu.memory_space<vmem>>, vector<1x128xf32>,
    %c1_i32_4 = arith.constant 1 : i32
    %c1_i32_5 = arith.constant 1 : i32
    %10 = arith.addi %c1_i32_5, %c1_i32_4 : i32
    %11 = arith.index_cast %10 : i32 to index
    %12 = memref.load %arg1[%11] : memref<9xi32, #tpu.memory_space<smem>>
    %13 = arith.index_cast %12 : i32 to index
    %c0_6 = arith.constant 0 : index
    %14 = vector.load %arg2[%13, %c0_6] : memref<64x128xf32, #tpu.memory_space<vmem>>, vector<1x128xf32>
    %15 = arith.index_cast %c1_i32_4 : i32 to index
    %c0_7 = arith.constant 0 : index
    %16 = vector.load %arg9[%15, %c0_7] : memref<8x128xf32, #tpu.memory_space<vmem>>, vector<1x128xf32>
    tpu.vector_store %arg9[%15, %c0_7], %14 {strides = array<i32>} : memref<8x128xf32, #tpu.memory_space<vmem>>, vector<1x128xf32>,
    %c2_i32 = arith.constant 2 : i32
    %c1_i32_8 = arith.constant 1 : i32
    %17 = arith.addi %c1_i32_8, %c2_i32 : i32
    %18 = arith.index_cast %17 : i32 to index
    %19 = memref.load %arg1[%18] : memref<9xi32, #tpu.memory_space<smem>>
    %20 = arith.index_cast %19 : i32 to index
    %c0_9 = arith.constant 0 : index
    %21 = vector.load %arg2[%20, %c0_9] : memref<64x128xf32, #tpu.memory_space<vmem>>, vector<1x128xf32>
    %22 = arith.index_cast %c2_i32 : i32 to index
    %c0_10 = arith.constant 0 : index
    %23 = vector.load %arg9[%22, %c0_10] : memref<8x128xf32, #tpu.memory_space<vmem>>, vector<1x128xf32>
    tpu.vector_store %arg9[%22, %c0_10], %21 {strides = array<i32>} : memref<8x128xf32, #tpu.memory_space<vmem>>, vector<1x128xf32>,
    %c3_i32 = arith.constant 3 : i32
    %c1_i32_11 = arith.constant 1 : i32
    %24 = arith.addi %c1_i32_11, %c3_i32 : i32
    %25 = arith.index_cast %24 : i32 to index
    %26 = memref.load %arg1[%25] : memref<9xi32, #tpu.memory_space<smem>>
    %27 = arith.index_cast %26 : i32 to index
    %c0_12 = arith.constant 0 : index
    %28 = vector.load %arg2[%27, %c0_12] : memref<64x128xf32, #tpu.memory_space<vmem>>, vector<1x128xf32>
    %29 = arith.index_cast %c3_i32 : i32 to index
    %c0_13 = arith.constant 0 : index
    %30 = vector.load %arg9[%29, %c0_13] : memref<8x128xf32, #tpu.memory_space<vmem>>, vector<1x128xf32>
    tpu.vector_store %arg9[%29, %c0_13], %28 {strides = array<i32>} : memref<8x128xf32, #tpu.memory_space<vmem>>, vector<1x128xf32>,
    %c4_i32 = arith.constant 4 : i32
    %c1_i32_14 = arith.constant 1 : i32
    %31 = arith.addi %c1_i32_14, %c4_i32 : i32
    %32 = arith.index_cast %31 : i32 to index
    %33 = memref.load %arg1[%32] : memref<9xi32, #tpu.memory_space<smem>>
    %34 = arith.index_cast %33 : i32 to index
    %c0_15 = arith.constant 0 : index
    %35 = vector.load %arg2[%34, %c0_15] : memref<64x128xf32, #tpu.memory_space<vmem>>, vector<1x128xf32>
    %36 = arith.index_cast %c4_i32 : i32 to index
    %c0_16 = arith.constant 0 : index
    %37 = vector.load %arg9[%36, %c0_16] : memref<8x128xf32, #tpu.memory_space<vmem>>, vector<1x128xf32>
    tpu.vector_store %arg9[%36, %c0_16], %35 {strides = array<i32>} : memref<8x128xf32, #tpu.memory_space<vmem>>, vector<1x128xf32>,
    %c5_i32 = arith.constant 5 : i32
    %c1_i32_17 = arith.constant 1 : i32
    %38 = arith.addi %c1_i32_17, %c5_i32 : i32
    %39 = arith.index_cast %38 : i32 to index
    %40 = memref.load %arg1[%39] : memref<9xi32, #tpu.memory_space<smem>>
    %41 = arith.index_cast %40 : i32 to index
    %c0_18 = arith.constant 0 : index
    %42 = vector.load %arg2[%41, %c0_18] : memref<64x128xf32, #tpu.memory_space<vmem>>, vector<1x128xf32>
    %43 = arith.index_cast %c5_i32 : i32 to index
    %c0_19 = arith.constant 0 : index
    %44 = vector.load %arg9[%43, %c0_19] : memref<8x128xf32, #tpu.memory_space<vmem>>, vector<1x128xf32>
    tpu.vector_store %arg9[%43, %c0_19], %42 {strides = array<i32>} : memref<8x128xf32, #tpu.memory_space<vmem>>, vector<1x128xf32>,
    %c6_i32 = arith.constant 6 : i32
    %c1_i32_20 = arith.constant 1 : i32
    %45 = arith.addi %c1_i32_20, %c6_i32 : i32
    %46 = arith.index_cast %45 : i32 to index
    %47 = memref.load %arg1[%46] : memref<9xi32, #tpu.memory_space<smem>>
    %48 = arith.index_cast %47 : i32 to index
    %c0_21 = arith.constant 0 : index
    %49 = vector.load %arg2[%48, %c0_21] : memref<64x128xf32, #tpu.memory_space<vmem>>, vector<1x128xf32>
    %50 = arith.index_cast %c6_i32 : i32 to index
    %c0_22 = arith.constant 0 : index
    %51 = vector.load %arg9[%50, %c0_22] : memref<8x128xf32, #tpu.memory_space<vmem>>, vector<1x128xf32>
    tpu.vector_store %arg9[%50, %c0_22], %49 {strides = array<i32>} : memref<8x128xf32, #tpu.memory_space<vmem>>, vector<1x128xf32>,
    %c7_i32 = arith.constant 7 : i32
    %c1_i32_23 = arith.constant 1 : i32
    %52 = arith.addi %c1_i32_23, %c7_i32 : i32
    %53 = arith.index_cast %52 : i32 to index
    %54 = memref.load %arg1[%53] : memref<9xi32, #tpu.memory_space<smem>>
    %55 = arith.index_cast %54 : i32 to index
    %c0_24 = arith.constant 0 : index
    %56 = vector.load %arg2[%55, %c0_24] : memref<64x128xf32, #tpu.memory_space<vmem>>, vector<1x128xf32>
    %57 = arith.index_cast %c7_i32 : i32 to index
    %c0_25 = arith.constant 0 : index
    %58 = vector.load %arg9[%57, %c0_25] : memref<8x128xf32, #tpu.memory_space<vmem>>, vector<1x128xf32>
    tpu.vector_store %arg9[%57, %c0_25], %56 {strides = array<i32>} : memref<8x128xf32, #tpu.memory_space<vmem>>, vector<1x128xf32>,
    %c8_i32 = arith.constant 8 : i32
    %c0_26 = arith.constant 0 : index
    %c0_27 = arith.constant 0 : index
    %59 = vector.load %arg9[%c0_26, %c0_27] : memref<8x128xf32, #tpu.memory_space<vmem>>, vector<8x128xf32>
    %c0_28 = arith.constant 0 : index
    %c0_29 = arith.constant 0 : index
    %60 = vector.load %arg4[%c0_28, %c0_29] : memref<128x256xf32, #tpu.memory_space<vmem>>, vector<128x256xf32>
    %cst_30 = arith.constant dense<0.000000e+00> : vector<8x256xf32>
    %61 = tpu.matmul %59, %60, %cst_30 {dimension_numbers = #tpu.dot_dimension_numbers<[1], [0], [0], [1], [0, 0, 1, 1], [], []>} : vector<8x128xf32>, vector<128x256xf32>, vector<8x256xf32> -> vector<8x256xf32>
    %c0_31 = arith.constant 0 : index
    %c0_32 = arith.constant 0 : index
    %62 = vector.load %arg5[%c0_31, %c0_32] : memref<1x256xf32, #tpu.memory_space<vmem>>, vector<1x256xf32>
    %63 = vector.broadcast %62 : vector<1x256xf32> to vector<8x256xf32>
    %64 = arith.addf %61, %63 : vector<8x256xf32>
    %c0_33 = arith.constant 0 : index
    %c0_34 = arith.constant 0 : index
    %65 = vector.load %arg10[%c0_33, %c0_34] : memref<8x256xf32, #tpu.memory_space<vmem>>, vector<8x256xf32>
    tpu.vector_store %arg10[%c0_33, %c0_34], %64 {strides = array<i32>} : memref<8x256xf32, #tpu.memory_space<vmem>>, vector<8x256xf32>,
    %c0_35 = arith.constant 0 : index
    %c0_36 = arith.constant 0 : index
    %66 = vector.load %arg6[%c0_35, %c0_36] : memref<128x256xf32, #tpu.memory_space<vmem>>, vector<128x256xf32>
    %c0_37 = arith.constant 0 : index
    %c0_38 = arith.constant 0 : index
    %67 = vector.load %arg7[%c0_37, %c0_38] : memref<1x256xf32, #tpu.memory_space<vmem>>, vector<1x256xf32>
    %c0_39 = arith.constant 0 : index
    %c0_40 = arith.constant 0 : index
    %68 = vector.load %arg3[%c0_39, %c0_40] : memref<1x128xf32, #tpu.memory_space<vmem>>, vector<1x128xf32>
    %c0_i32_41 = arith.constant 0 : i32
    %69 = arith.subi %0, %c0_i32_41 : i32
    %70 = arith.addi %c0_i32_41, %69 : i32
    %c1_i32_42 = arith.constant 1 : i32
    %71 = scf.for %arg11 = %c0_i32_41 to %70 step %c1_i32_42 iter_args(%arg12 = %68) -> (vector<1x128xf32>)  : i32 {
      %cst_43 = arith.constant dense<0.000000e+00> : vector<1x256xf32>
      %72 = tpu.matmul %arg12, %66, %cst_43 {dimension_numbers = #tpu.dot_dimension_numbers<[1], [0], [0], [1], [0, 0, 1, 1], [], []>} : vector<1x128xf32>, vector<128x256xf32>, vector<1x256xf32> -> vector<1x256xf32>
      %73 = arith.addf %72, %67 : vector<1x256xf32>
      %74 = arith.index_cast %arg11 : i32 to index
      %c0_44 = arith.constant 0 : index
      %75 = vector.load %arg10[%74, %c0_44] : memref<8x256xf32, #tpu.memory_space<vmem>>, vector<1x256xf32>
      %76 = vector.extract_strided_slice %75 {offsets = [0, 0], sizes = [1, 128], strides = [1, 1]} : vector<1x256xf32> to vector<1x128xf32>
      %77 = vector.extract_strided_slice %73 {offsets = [0, 0], sizes = [1, 128], strides = [1, 1]} : vector<1x256xf32> to vector<1x128xf32>
      %78 = arith.addf %76, %77 : vector<1x128xf32>
      %79 = arith.negf %78 : vector<1x128xf32>
      %80 = math.exp %79 : vector<1x128xf32>
      %cst_45 = arith.constant 1.000000e+00 : f32
      %81 = vector.broadcast %cst_45 : f32 to vector<1x128xf32>
      %82 = arith.addf %81, %80 : vector<1x128xf32>
      %83 = arith.divf %81, %82 : vector<1x128xf32>
      %84 = vector.extract_strided_slice %75 {offsets = [0, 128], sizes = [1, 128], strides = [1, 1]} : vector<1x256xf32> to vector<1x128xf32>
      %85 = vector.extract_strided_slice %73 {offsets = [0, 128], sizes = [1, 128], strides = [1, 1]} : vector<1x256xf32> to vector<1x128xf32>
      %86 = arith.mulf %83, %85 : vector<1x128xf32>
      %87 = arith.addf %84, %86 : vector<1x128xf32>
      %88 = math.tanh %87 : vector<1x128xf32>
      %c96_i32 = arith.constant 96 : i32
      %89 = tpu.dynamic_rotate %83 by %c96_i32 dim 1 : vector<1x128xf32>, i32 -> vector<1x128xf32>
      %cst_46 = arith.constant 1.000000e+00 : f32
      %90 = vector.broadcast %cst_46 : f32 to vector<1x128xf32>
      %91 = arith.subf %90, %89 : vector<1x128xf32>
      %92 = arith.mulf %91, %88 : vector<1x128xf32>
      %93 = arith.mulf %89, %arg12 : vector<1x128xf32>
      %94 = arith.addf %92, %93 : vector<1x128xf32>
      %95 = arith.index_cast %arg11 : i32 to index
      %c0_47 = arith.constant 0 : index
      %96 = vector.load %arg8[%95, %c0_47] : memref<8x128xf32, #tpu.memory_space<vmem>>, vector<1x128xf32>
      tpu.vector_store %arg8[%95, %c0_47], %94 {strides = array<i32>} : memref<8x128xf32, #tpu.memory_space<vmem>>, vector<1x128xf32>,
      scf.yield %94 : vector<1x128xf32>
    }
    return
  }
  func.func @transform_0(%arg0: i32, %arg1: memref<9xi32, #tpu.memory_space<smem>>) -> (i32, i32) {
    %c0_i32 = arith.constant 0 : i32
    %c0_i32_0 = arith.constant 0 : i32
    %c0_i32_1 = arith.constant 0 : i32
    return %c0_i32, %c0_i32_0 : i32, i32
  }
  func.func @transform_1(%arg0: i32, %arg1: memref<9xi32, #tpu.memory_space<smem>>) -> (i32, i32) {
    %c0_i32 = arith.constant 0 : i32
    %c0_i32_0 = arith.constant 0 : i32
    %c0_i32_1 = arith.constant 0 : i32
    return %c0_i32, %c0_i32_0 : i32, i32
  }
  func.func @transform_2(%arg0: i32, %arg1: memref<9xi32, #tpu.memory_space<smem>>) -> (i32, i32) {
    %c0_i32 = arith.constant 0 : i32
    %c0_i32_0 = arith.constant 0 : i32
    %c0_i32_1 = arith.constant 0 : i32
    return %c0_i32, %c0_i32_0 : i32, i32
  }
  func.func @transform_3(%arg0: i32, %arg1: memref<9xi32, #tpu.memory_space<smem>>) -> (i32, i32) {
    %c0_i32 = arith.constant 0 : i32
    %c0_i32_0 = arith.constant 0 : i32
    %c0_i32_1 = arith.constant 0 : i32
    return %c0_i32, %c0_i32_0 : i32, i32
  }
  func.func @transform_4(%arg0: i32, %arg1: memref<9xi32, #tpu.memory_space<smem>>) -> (i32, i32) {
    %c0_i32 = arith.constant 0 : i32
    %c0_i32_0 = arith.constant 0 : i32
    %c0_i32_1 = arith.constant 0 : i32
    return %c0_i32, %c0_i32_0 : i32, i32
  }
  func.func @transform_5(%arg0: i32, %arg1: memref<9xi32, #tpu.memory_space<smem>>) -> (i32, i32) {
    %c0_i32 = arith.constant 0 : i32
    %c0_i32_0 = arith.constant 0 : i32
    %c0_i32_1 = arith.constant 0 : i32
    return %c0_i32, %c0_i32_0 : i32, i32
  }
  func.func @transform_6(%arg0: i32, %arg1: memref<9xi32, #tpu.memory_space<smem>>) -> (i32, i32) {
    %c0_i32 = arith.constant 0 : i32
    %c0_i32_0 = arith.constant 0 : i32
    %c0_i32_1 = arith.constant 0 : i32
    return %c0_i32, %c0_i32_0 : i32, i32
  }
}

</mosaic_0001>

<llo_original>
// kernel: _encode_padded.1
$region0: #{_encode_padded.1}
  #allocation0 [shape = 'u32[]', space=smem, size = 0x4, offset = 0x4, fixed_abs, tag = 'smem constant byte address 0x4 - core index']
  #allocation1 [shape = 'u32[72,128]{1,0:T(1,128)}', space=vmem, size = 0x9000, scoped, tag = 'internal scratch']
  #allocation2 [shape = 'f32[8,128]{1,0:T(8,128)}', space=vmem, size = 0x1000, scoped, tag = 'scratch operand']
  #allocation3 [shape = 'f32[8,256]{1,0:T(8,128)}', space=vmem, size = 0x2000, scoped, tag = 'scratch operand']
  #allocation4 [shape = 's32[1]{0}', space=sflag, size = 0x4, scoped, tag = 'scoped memory for _encode_padded.1']
  #allocation5 [shape = 'u8[512]{0}', space=smem, size = 0x200, scoped, tag = 'prefetched SMEM operand 0']
  %s0 = inlined_call_operand.vmem [shape: s32[9], index: 0, kind: input, shape index: {}]
  %s1 = inlined_call_operand.hbm [shape: f32[64,128], index: 1, kind: input, shape index: {}]
  %s2 = inlined_call_operand.vmem [shape: f32[1,128], index: 2, kind: input, shape index: {}]
  %s3 = inlined_call_operand.hbm [shape: f32[128,256], index: 3, kind: input, shape index: {}]
  %s4 = inlined_call_operand.vmem [shape: f32[1,256], index: 4, kind: input, shape index: {}]
  %s5 = inlined_call_operand.hbm [shape: f32[128,256], index: 5, kind: input, shape index: {}]
  %s6 = inlined_call_operand.vmem [shape: f32[1,256], index: 6, kind: input, shape index: {}]
  %s7 = inlined_call_operand.hbm [shape: f32[8,128], index: 7, kind: output, shape index: {}]
  %s8 = sld [smem:[#allocation0]]
  $region53: #{_encode_padded.1} parent=0
    _
  %s10 = ssub.s32 1, %s8
  %s11 = scalar_select 0, %s10, %s8
  %s13 = sshll.u32 %s0, 4
  %s14 = int_to_ptr.vmem [resolvable:$true] %s13
  %16 = dma.vmem_to_smem %s14, 16, [#allocation5], [#allocation4]
  %18 = dma.done [#allocation4], 16
  %19 = sfence
  $region1: #{_encode_padded.1} parent=0
    #allocation6 [shape = 'u8[32768]{0}', space=vmem, size = 0x8000, scoped, tag = 'input window, operand 1, single buffered']
    #allocation7 [shape = 's32[1]{0}', space=sflag, size = 0x4, scoped, tag = 'scoped memory for _encode_padded.1']
    #allocation8 [shape = 's32[1]{0}', space=sflag, size = 0x4, scoped, tag = 'scoped memory for _encode_padded.1']
    #allocation9 [shape = 'u8[131072]{0}', space=vmem, size = 0x20000, scoped, tag = 'input window, operand 3, single buffered']
    #allocation10 [shape = 's32[1]{0}', space=sflag, size = 0x4, scoped, tag = 'scoped memory for _encode_padded.1']
    #allocation11 [shape = 'u8[131072]{0}', space=vmem, size = 0x20000, scoped, tag = 'input window, operand 5, single buffered']
    #allocation12 [shape = 'u8[4096]{0}', space=vmem, size = 0x1000, scoped, tag = 'output window, operand 0, single buffered']
    %20 = vsyncpa [#allocation7], 0
    %21 = vsyncpa [#allocation10], 0
    %22 = vsyncpa [#allocation8], 0
    // Predicated region
    $region2: #{_encode_padded.1} parent=1 // pred_check
      _
    $region3: #{_encode_padded.1} parent=1 // pred_check_branch
      %24 = sbr.rel (0) target = $region5
    $region4: #{_encode_padded.1} parent=1 // pred_region
      %26 = vsyncadd [#allocation7], 0
      %s27 = sshll.u32 %s1, 4
      %s28 = int_to_ptr.hbm [resolvable:$true] %s27
      %s29 = sshll.u32 [#allocation6], 4
      %s30 = int_to_ptr.vmem [resolvable:$true] %s29
      %35 = dma.hbm_to_vmem [thread:$0]  %s28, 1024, %s30, [#allocation7], 128, 128, 8
    $region5: #{_encode_padded.1} parent=1 // pred_fallthru
      _
    // Predicated region
    $region6: #{_encode_padded.1} parent=1 // pred_check
      _
    $region7: #{_encode_padded.1} parent=1 // pred_check_branch
      %37 = sbr.rel (0) target = $region9
    $region8: #{_encode_padded.1} parent=1 // pred_region
      _
    $region9: #{_encode_padded.1} parent=1 // pred_fallthru
      _
    // Predicated region
    $region10: #{_encode_padded.1} parent=1 // pred_check
      _
    $region11: #{_encode_padded.1} parent=1 // pred_check_branch
      %39 = sbr.rel (0) target = $region13
    $region12: #{_encode_padded.1} parent=1 // pred_region
      %41 = vsyncadd [#allocation10], 0
      %s42 = sshll.u32 %s3, 4
      %s43 = int_to_ptr.hbm [resolvable:$true] %s42
      %s44 = sshll.u32 [#allocation9], 4
      %s45 = int_to_ptr.vmem [resolvable:$true] %s44
      %50 = dma.hbm_to_vmem [thread:$0]  %s43, 4096, %s45, [#allocation10], 256, 256, 16
    $region13: #{_encode_padded.1} parent=1 // pred_fallthru
      _
    // Predicated region
    $region14: #{_encode_padded.1} parent=1 // pred_check
      _
    $region15: #{_encode_padded.1} parent=1 // pred_check_branch
      %52 = sbr.rel (0) target = $region17
    $region16: #{_encode_padded.1} parent=1 // pred_region
      _
    $region17: #{_encode_padded.1} parent=1 // pred_fallthru
      _
    // Predicated region
    $region18: #{_encode_padded.1} parent=1 // pred_check
      _
    $region19: #{_encode_padded.1} parent=1 // pred_check_branch
      %54 = sbr.rel (0) target = $region21
    $region20: #{_encode_padded.1} parent=1 // pred_region
      %56 = vsyncadd [#allocation10], 0
      %s57 = sshll.u32 %s5, 4
      %s58 = int_to_ptr.hbm [resolvable:$true] %s57
      %s59 = sshll.u32 [#allocation11], 4
      %s60 = int_to_ptr.vmem [resolvable:$true] %s59
      %65 = dma.hbm_to_vmem [thread:$0]  %s58, 4096, %s60, [#allocation10], 256, 256, 16
    $region21: #{_encode_padded.1} parent=1 // pred_fallthru
      _
    // Predicated region
    $region22: #{_encode_padded.1} parent=1 // pred_check
      _
    $region23: #{_encode_padded.1} parent=1 // pred_check_branch
      %67 = sbr.rel (0) target = $region25
    $region24: #{_encode_padded.1} parent=1 // pred_region
      _
    $region25: #{_encode_padded.1} parent=1 // pred_fallthru
      _
    // Predicated region
    $region26: #{_encode_padded.1} parent=1 // pred_check
      _
    $region27: #{_encode_padded.1} parent=1 // pred_check_branch
      %69 = sbr.rel (0) target = $region29
    $region28: #{_encode_padded.1} parent=1 // pred_region
      %71 = dma.done [#allocation7], 1024
    $region29: #{_encode_padded.1} parent=1 // pred_fallthru
      _
    // Predicated region
    $region30: #{_encode_padded.1} parent=1 // pred_check
      _
    $region31: #{_encode_padded.1} parent=1 // pred_check_branch
      %73 = sbr.rel (0) target = $region33
    $region32: #{_encode_padded.1} parent=1 // pred_region
      %75 = dma.done [#allocation10], 4096
    $region33: #{_encode_padded.1} parent=1 // pred_fallthru
      _
    // Predicated region
    $region34: #{_encode_padded.1} parent=1 // pred_check
      _
    $region35: #{_encode_padded.1} parent=1 // pred_check_branch
      %77 = sbr.rel (0) target = $region37
    $region36: #{_encode_padded.1} parent=1 // pred_region
      %79 = dma.done [#allocation10], 4096
    $region37: #{_encode_padded.1} parent=1 // pred_fallthru
      _
    %s80 = sld [smem:[#allocation5]]
    %81 = vst [vmem:[#allocation12] sm:$0xff] 0.0
    %s82 = sld [smem:[#allocation5 + $0x1]]
    %s83 = scalar_lea.vmem [#allocation6], %s82
    %v84 = vld [vmem:[%s83] sm:$0x1]
    %85 = vst [vmem:[#allocation2] sm:$0x1] %v84
    %s86 = sld [smem:[#allocation5 + $0x2]]
    %s87 = scalar_lea.vmem [#allocation6], %s86
    %v88 = vld [vmem:[%s87] sm:$0x1]
    %89 = vst [vmem:[#allocation2 + $0x1] sm:$0x1] %v88
    %s90 = sld [smem:[#allocation5 + $0x3]]
    %s91 = scalar_lea.vmem [#allocation6], %s90
    %v92 = vld [vmem:[%s91] sm:$0x1]
    %93 = vst [vmem:[#allocation2 + $0x2] sm:$0x1] %v92
    %s94 = sld [smem:[#allocation5 + $0x4]]
    %s95 = scalar_lea.vmem [#allocation6], %s94
    %v96 = vld [vmem:[%s95] sm:$0x1]
    %97 = vst [vmem:[#allocation2 + $0x3] sm:$0x1] %v96
    %s98 = sld [smem:[#allocation5 + $0x5]]
    %s99 = scalar_lea.vmem [#allocation6], %s98
    %v100 = vld [vmem:[%s99] sm:$0x1]
    %101 = vst [vmem:[#allocation2 + $0x4] sm:$0x1] %v100
    %s102 = sld [smem:[#allocation5 + $0x6]]
    %s103 = scalar_lea.vmem [#allocation6], %s102
    %v104 = vld [vmem:[%s103] sm:$0x1]
    %105 = vst [vmem:[#allocation2 + $0x5] sm:$0x1] %v104
    %s106 = sld [smem:[#allocation5 + $0x7]]
    %s107 = scalar_lea.vmem [#allocation6], %s106
    %v108 = vld [vmem:[%s107] sm:$0x1]
    %109 = vst [vmem:[#allocation2 + $0x6] sm:$0x1] %v108
    %s110 = sld [smem:[#allocation5 + $0x8]]
    %s111 = scalar_lea.vmem [#allocation6], %s110
    %v112 = vld [vmem:[%s111] sm:$0x1]
    %113 = vst [vmem:[#allocation2 + $0x7] sm:$0x1] %v112
    %v114 = vld [vmem:[#allocation2] sm:$0xff]
    %v115 = vld [vmem:[#allocation9] sm:$0xff]
    %v116 = vld [vmem:[#allocation9 + $0x8] sm:$0xff]
    %v117 = vld [vmem:[#allocation9 + $0x10] sm:$0xff]
    %v118 = vld [vmem:[#allocation9 + $0x18] sm:$0xff]
    %v119 = vld [vmem:[#allocation9 + $0x20] sm:$0xff]
    %v120 = vld [vmem:[#allocation9 + $0x28] sm:$0xff]
    %v121 = vld [vmem:[#allocation9 + $0x30] sm:$0xff]
    %v122 = vld [vmem:[#allocation9 + $0x38] sm:$0xff]
    %v123 = vld [vmem:[#allocation9 + $0x40] sm:$0xff]
    %v124 = vld [vmem:[#allocation9 + $0x48] sm:$0xff]
    %v125 = vld [vmem:[#allocation9 + $0x50] sm:$0xff]
    %v126 = vld [vmem:[#allocation9 + $0x58] sm:$0xff]
    %v127 = vld [vmem:[#allocation9 + $0x60] sm:$0xff]
    %v128 = vld [vmem:[#allocation9 + $0x68] sm:$0xff]
    %v129 = vld [vmem:[#allocation9 + $0x70] sm:$0xff]
    %v130 = vld [vmem:[#allocation9 + $0x78] sm:$0xff]
    %v131 = vld [vmem:[#allocation9 + $0x80] sm:$0xff]
    %v132 = vld [vmem:[#allocation9 + $0x88] sm:$0xff]
    %v133 = vld [vmem:[#allocation9 + $0x90] sm:$0xff]
    %v134 = vld [vmem:[#allocation9 + $0x98] sm:$0xff]
    %v135 = vld [vmem:[#allocation9 + $0xa0] sm:$0xff]
    %v136 = vld [vmem:[#allocation9 + $0xa8] sm:$0xff]
    %v137 = vld [vmem:[#allocation9 + $0xb0] sm:$0xff]
    %v138 = vld [vmem:[#allocation9 + $0xb8] sm:$0xff]
    %v139 = vld [vmem:[#allocation9 + $0xc0] sm:$0xff]
    %v140 = vld [vmem:[#allocation9 + $0xc8] sm:$0xff]
    %v141 = vld [vmem:[#allocation9 + $0xd0] sm:$0xff]
    %v142 = vld [vmem:[#allocation9 + $0xd8] sm:$0xff]
    %v143 = vld [vmem:[#allocation9 + $0xe0] sm:$0xff]
    %v144 = vld [vmem:[#allocation9 + $0xe8] sm:$0xff]
    %v145 = vld [vmem:[#allocation9 + $0xf0] sm:$0xff]
    %v146 = vld [vmem:[#allocation9 + $0xf8] sm:$0xff]
    %v147 = vld [vmem:[%s4] sm:$0x3]
    %v149 = vperm.slane %v147, 0
    %v150 = vperm.slane %v147, 1
    %153 = vmatpush.msra.mxu0 %v145
    %154 = vmatpush.msra.mxu0 %v143
    %155 = vmatpush.msra.mxu0 %v141
    %156 = vmatpush.msra.mxu0 %v139
    %157 = vmatpush.msra.mxu0 %v137
    %158 = vmatpush.msra.mxu0 %v135
    %159 = vmatpush.msra.mxu0 %v133
    %160 = vmatpush.msra.mxu0 %v131
    %161 = vmatpush.msra.mxu0 %v129
    %162 = vmatpush.msra.mxu0 %v127
    %163 = vmatpush.msra.mxu0 %v125
    %164 = vmatpush.msra.mxu0 %v123
    %165 = vmatpush.msra.mxu0 %v121
    %166 = vmatpush.msra.mxu0 %v119
    %167 = vmatpush.msra.mxu0 %v117
    %168 = vmatpush.msra.mxu0 %v115
    %169 = vmatmul.f32.gmra.mxu0 %v114
    %v170 = vpop.f32.mrf.mxu0
    %v171 = vadd.f32 %v149, %v170
    %172 = vdwg.mxu0
    %173 = vmatpush.msra.mxu0 %v146
    %174 = vmatpush.msra.mxu0 %v144
    %175 = vmatpush.msra.mxu0 %v142
    %176 = vmatpush.msra.mxu0 %v140
    %177 = vmatpush.msra.mxu0 %v138
    %178 = vmatpush.msra.mxu0 %v136
    %179 = vmatpush.msra.mxu0 %v134
    %180 = vmatpush.msra.mxu0 %v132
    %181 = vmatpush.msra.mxu0 %v130
    %182 = vmatpush.msra.mxu0 %v128
    %183 = vmatpush.msra.mxu0 %v126
    %184 = vmatpush.msra.mxu0 %v124
    %185 = vmatpush.msra.mxu0 %v122
    %186 = vmatpush.msra.mxu0 %v120
    %187 = vmatpush.msra.mxu0 %v118
    %188 = vmatpush.msra.mxu0 %v116
    %189 = vmatmul.f32.gmra.mxu0 %v114
    %v190 = vpop.f32.mrf.mxu0
    %v191 = vadd.f32 %v150, %v190
    %192 = vdwg.mxu0
    %193 = vst [vmem:[#allocation3] sm:$0xff] %v171
    %194 = vst [vmem:[#allocation3 + $0x8] sm:$0xff] %v191
    %v195 = vld [vmem:[#allocation11] sm:$0xff]
    %v196 = vld [vmem:[#allocation11 + $0x8] sm:$0xff]
    %v197 = vld [vmem:[#allocation11 + $0x10] sm:$0xff]
    %v198 = vld [vmem:[#allocation11 + $0x18] sm:$0xff]
    %v199 = vld [vmem:[#allocation11 + $0x20] sm:$0xff]
    %v200 = vld [vmem:[#allocation11 + $0x28] sm:$0xff]
    %v201 = vld [vmem:[#allocation11 + $0x30] sm:$0xff]
    %v202 = vld [vmem:[#allocation11 + $0x38] sm:$0xff]
    %v203 = vld [vmem:[#allocation11 + $0x40] sm:$0xff]
    %v204 = vld [vmem:[#allocation11 + $0x48] sm:$0xff]
    %v205 = vld [vmem:[#allocation11 + $0x50] sm:$0xff]
    %v206 = vld [vmem:[#allocation11 + $0x58] sm:$0xff]
    %v207 = vld [vmem:[#allocation11 + $0x60] sm:$0xff]
    %v208 = vld [vmem:[#allocation11 + $0x68] sm:$0xff]
    %v209 = vld [vmem:[#allocation11 + $0x70] sm:$0xff]
    %v210 = vld [vmem:[#allocation11 + $0x78] sm:$0xff]
    %v211 = vld [vmem:[#allocation11 + $0x80] sm:$0xff]
    %v212 = vld [vmem:[#allocation11 + $0x88] sm:$0xff]
    %v213 = vld [vmem:[#allocation11 + $0x90] sm:$0xff]
    %v214 = vld [vmem:[#allocation11 + $0x98] sm:$0xff]
    %v215 = vld [vmem:[#allocation11 + $0xa0] sm:$0xff]
    %v216 = vld [vmem:[#allocation11 + $0xa8] sm:$0xff]
    %v217 = vld [vmem:[#allocation11 + $0xb0] sm:$0xff]
    %v218 = vld [vmem:[#allocation11 + $0xb8] sm:$0xff]
    %v219 = vld [vmem:[#allocation11 + $0xc0] sm:$0xff]
    %v220 = vld [vmem:[#allocation11 + $0xc8] sm:$0xff]
    %v221 = vld [vmem:[#allocation11 + $0xd0] sm:$0xff]
    %v222 = vld [vmem:[#allocation11 + $0xd8] sm:$0xff]
    %v223 = vld [vmem:[#allocation11 + $0xe0] sm:$0xff]
    %v224 = vld [vmem:[#allocation11 + $0xe8] sm:$0xff]
    %v225 = vld [vmem:[#allocation11 + $0xf0] sm:$0xff]
    %v226 = vld [vmem:[#allocation11 + $0xf8] sm:$0xff]
    %v227 = vld [vmem:[%s6] sm:$0x3]
    %v228 = vld [vmem:[%s2] sm:$0x1]
    // While loop
    $region38: #{_encode_padded.1} parent=1 // loop_pre_header
      _
    $region39: #{_encode_padded.1} parent=1 // loop_header
      %s230 = sphi 0, %s232
      %p231 = scmp.ge.s32.totalorder %s230, %s80
      %v235 = vphi %v228, %v321
    $region40: #{_encode_padded.1} parent=1 // loop_header_branch
      %234 = sbr.rel (%p231) target = $region44
    $region41: #{_encode_padded.1} parent=1 // loop_body
      %v237 = vperm.slane %v227, 0
      %v238 = vperm.slane %v227, 1
      %241 = vmatpush.msra.mxu0 %v225
      %242 = vmatpush.msra.mxu0 %v223
      %243 = vmatpush.msra.mxu0 %v221
      %244 = vmatpush.msra.mxu0 %v219
      %245 = vmatpush.msra.mxu0 %v217
      %246 = vmatpush.msra.mxu0 %v215
      %247 = vmatpush.msra.mxu0 %v213
      %248 = vmatpush.msra.mxu0 %v211
      %249 = vmatpush.msra.mxu0 %v209
      %250 = vmatpush.msra.mxu0 %v207
      %251 = vmatpush.msra.mxu0 %v205
      %252 = vmatpush.msra.mxu0 %v203
      %253 = vmatpush.msra.mxu0 %v201
      %254 = vmatpush.msra.mxu0 %v199
      %255 = vmatpush.msra.mxu0 %v197
      %256 = vmatpush.msra.mxu0 %v195
      %257 = vmatmul.f32.gmra.mxu0 %v235
      %v258 = vpop.f32.mrf.mxu0
      %v259 = vadd.f32 %v237, %v258
      %260 = vdwg.mxu0
      %261 = vmatpush.msra.mxu0 %v226
      %262 = vmatpush.msra.mxu0 %v224
      %263 = vmatpush.msra.mxu0 %v222
      %264 = vmatpush.msra.mxu0 %v220
      %265 = vmatpush.msra.mxu0 %v218
      %266 = vmatpush.msra.mxu0 %v216
      %267 = vmatpush.msra.mxu0 %v214
      %268 = vmatpush.msra.mxu0 %v212
      %269 = vmatpush.msra.mxu0 %v210
      %270 = vmatpush.msra.mxu0 %v208
      %271 = vmatpush.msra.mxu0 %v206
      %272 = vmatpush.msra.mxu0 %v204
      %273 = vmatpush.msra.mxu0 %v202
      %274 = vmatpush.msra.mxu0 %v200
      %275 = vmatpush.msra.mxu0 %v198
      %276 = vmatpush.msra.mxu0 %v196
      %277 = vmatmul.f32.gmra.mxu0 %v235
      %v278 = vpop.f32.mrf.mxu0
      %v279 = vadd.f32 %v238, %v278
      %280 = vdwg.mxu0
      %s281 = sshra.s32 %s230, 3
      %s282 = sand.u32 %s230, 7
      %s283 = sshra.s32 %s230, 3
      %s284 = sand.u32 %s230, 7
      %s285 = smul.u32 %s281, 2
      %s286 = smul.u32 %s285, 8
      %s287 = sadd.s32 %s286, %s284
      %s288 = scalar_lea.vmem [#allocation3], %s287
      %v289 = vld [vmem:[%s288] ss:$8 sm:$0x3]
      %v290 = vadd.f32 %v289, %v259
      %v291 = vxor.u32 %v290, 2147483648
      %v292 = vmul.f32 %v291, 1.442695
      %v293 = vpow.pop %v292
      %v294 = vadd.f32 %v293, 1.0
      %v295 = vrcp.pop %v294
      %v296 = vmul.f32 %v294, %v295
      %v297 = vsub.f32 1.0, %v296
      %v298 = vmul.f32 %v295, %v297
      %v299 = vadd.f32 %v295, %v298
      %vm300 = vweird.f32 %v294
      %vm301 = vweird.f32 %v295
      %vm302 = vmor %vm300, %vm301
      %v303 = vsel %vm302, %v295, %v299
      %v304 = vand.u32 2147483647, %v294
      %vm305 = vcmp.eq.f32.partialorder %v304, 8.507059e+37
      %v306 = vand.u32 %v294, 2147483648
      %v307 = vor.u32 1.1754944e-38, %v306
      %v308 = vsel %vm305, %v307, %v303
      %v309 = vmul.f32 1.0, %v308
      %v310 = vmul.f32 %v309, %v279
      %v312 = vrot.slane %v289, 1
      %v314 = vadd.f32 %v312, %v310
      %v315 = vtanh.pop %v314
      %316 = vrot.lane.b32.xlu0 %v309, 96
      %v317 = vpop.permute.xlu0 %316
      %v318 = vsub.f32 1.0, %v317
      %v319 = vmul.f32 %v318, %v315
      %v320 = vmul.f32 %v317, %v235
      %v321 = vadd.f32 %v319, %v320
      %s322 = scalar_lea.vmem [#allocation12], %s230
      %323 = vst [vmem:[%s322] sm:$0x1] %v321
    $region42: #{_encode_padded.1} parent=1 // loop_footer
      %s232 = sadd.s32 %s230, 1
    $region43: #{_encode_padded.1} parent=1 // loop_footer_branch
      %229 = sbr.rel target = $region39
    $region44: #{_encode_padded.1} parent=1 // loop_exit
      _
    // Predicated region
    $region45: #{_encode_padded.1} parent=1 // pred_check
      _
    $region46: #{_encode_padded.1} parent=1 // pred_check_branch
      %325 = sbr.rel (0) target = $region48
    $region47: #{_encode_padded.1} parent=1 // pred_region
      %327 = vsyncadd [#allocation8], 0
      %s329 = sshll.u32 [#allocation12], 4
      %s330 = int_to_ptr.vmem [resolvable:$true] %s329
      %s331 = sshll.u32 %s7, 4
      %s332 = int_to_ptr.hbm [resolvable:$true] %s331
      %334 = dma.vmem_to_hbm [thread:$0]  %s330, 128, %s332, [#allocation8]
    $region48: #{_encode_padded.1} parent=1 // pred_fallthru
      _
    // Predicated region
    $region49: #{_encode_padded.1} parent=1 // pred_check
      _
    $region50: #{_encode_padded.1} parent=1 // pred_check_branch
      %336 = sbr.rel (0) target = $region52
    $region51: #{_encode_padded.1} parent=1 // pred_region
      %338 = dma.done [#allocation8], 128
    $region52: #{_encode_padded.1} parent=1 // pred_fallthru
      _
    %339 = vsyncpa [#allocation7], 1
    %340 = vsyncpa [#allocation10], 1
    %341 = vsyncpa [#allocation8], 1

</llo_original>
